<compile_context>
chip_gen: v7x
topology: tpu7x:2x2x1
jax: 0.10.0
libtpu: 0.0.40
codegen_flags: <defaults>
</compile_context>

<pallas_src>
import jax
import jax.numpy as jnp
from jax import lax
from jax.experimental import pallas as pl
from jax.experimental.pallas import tpu as pltpu


def _round_up(n, m):
    return ((n + m - 1) // m) * m


def _critic_kernel(x_ref, y_ref,
                   w1x_ref, w1y_ref, b1_ref,
                   w2_ref, b2_ref,
                   w3_ref, b3_ref,
                   w4_ref, b4_ref,
                   wo_ref, bo_ref,
                   out_ref):
    """One batch tile of the SmartCritic MLP.

    x_ref, y_ref : (tile, y_dim)         activations for this batch tile
    wN / bN      : resident weights      (hidden padded to a lane multiple)
    wo_ref       : (1, hidden_pad)       output weight stored as a row
    bo_ref       : (1,) in SMEM          output bias scalar
    out_ref      : (1, 1, tile)          lane-dense output row
    """
    # Layer 0: Linear(2*y_dim -> hidden) + ReLU.
    # torch.cat([x, y], 1) @ W1  ==  x @ W1[:y_dim] + y @ W1[y_dim:], so the
    # concat never materializes in HBM.
    h = (jnp.dot(x_ref[...], w1x_ref[...], preferred_element_type=jnp.float32)
         + jnp.dot(y_ref[...], w1y_ref[...], preferred_element_type=jnp.float32)
         + b1_ref[...])
    h = jnp.maximum(h, 0.0)

    # n_layers = 3 hidden layers: Linear(hidden, hidden) + LeakyReLU(0.01).
    for w_ref, b_ref in ((w2_ref, b2_ref), (w3_ref, b3_ref), (w4_ref, b4_ref)):
        h = jnp.dot(h, w_ref[...], preferred_element_type=jnp.float32) + b_ref[...]
        h = jnp.where(h > 0.0, h, 0.01 * h)

    # Output layer: Linear(hidden, 1), computed as wo_row . h^T so the result
    # lands directly as a lane-dense (1, tile) row instead of a masked
    # (tile, 1) column.
    out_row = lax.dot_general(
        wo_ref[...], h,
        dimension_numbers=(((1,), (1,)), ((), ())),
        preferred_element_type=jnp.float32)                 # (1, tile)
    out_ref[0] = out_row + bo_ref[0]


def _prepare_params(params, lane=128):
    """Split W1 into x/y halves, pad hidden to a lane multiple, Wo as a row.

    Padding is exact: padded hidden units get zero incoming weights and zero
    bias (ReLU/LeakyReLU(0) == 0) and zero outgoing weight into the head, so
    the padded network computes exactly the original function.
    """
    (w1, b1), (w2, b2), (w3, b3), (w4, b4), (wo, bo) = params
    in_dim, hidden = w1.shape
    y_dim = in_dim // 2
    hp = _round_up(hidden, lane)
    ph = hp - hidden

    def pad_cols(a):                       # pad feature (lane) axis
        return jnp.pad(a.reshape(1, -1) if a.ndim == 1 else a, ((0, 0), (0, ph)))

    def pad_both(a):                       # pad both hidden axes
        return jnp.pad(a, ((0, ph), (0, ph)))

    w1x = jnp.pad(w1[:y_dim], ((0, 0), (0, ph)))             # (y_dim, hp)
    w1y = jnp.pad(w1[y_dim:], ((0, 0), (0, ph)))             # (y_dim, hp)
    b1p = pad_cols(b1.reshape(1, -1))                        # (1, hp)
    w2p, b2p = pad_both(w2), pad_cols(b2.reshape(1, -1))
    w3p, b3p = pad_both(w3), pad_cols(b3.reshape(1, -1))
    w4p, b4p = pad_both(w4), pad_cols(b4.reshape(1, -1))
    wo_row = jnp.pad(wo.reshape(hidden, 1).T, ((0, 0), (0, ph)))  # (1, hp)
    bo_s = bo.reshape(-1)[:1].astype(jnp.float32)                 # (1,) scalar
    return (w1x, w1y, b1p, w2p, b2p, w3p, b3p, w4p, b4p, wo_row, bo_s), y_dim, hp


def smart_critic_forward(x, y, params, *, batch_tile=512):
    """x: [B, y_dim], y: [B, y_dim] -> [B, 1] (float32)."""
    x = x.astype(jnp.float32)
    y = y.astype(jnp.float32)
    B, y_dim_in = x.shape
    assert y.shape == (B, y_dim_in)

    (w1x, w1y, b1, w2, b2, w3, b3, w4, b4, wo_row, bo), y_dim, hp = \
        _prepare_params(params)
    assert y_dim == y_dim_in

    # Batch tiling: large tiles amortize the ~0.35us/grid-step overhead and
    # keep the MXU M-dimension full.  Small batches collapse to a single tile;
    # the batch is zero-padded to a tile multiple and padded rows sliced off.
    if B <= batch_tile:
        tile = _round_up(B, 8)
    else:
        tile = _round_up(batch_tile, 128)
    B_pad = _round_up(B, tile)
    if B_pad != B:
        x = jnp.pad(x, ((0, B_pad - B), (0, 0)))
        y = jnp.pad(y, ((0, B_pad - B), (0, 0)))
    n_tiles = B_pad // tile

    batch_map = lambda i: (i, 0)
    full_map = lambda i: (0, 0)

    in_specs = [
        pl.BlockSpec((tile, y_dim), batch_map),              # x tile
        pl.BlockSpec((tile, y_dim), batch_map),              # y tile
        pl.BlockSpec((y_dim, hp), full_map),                 # W1 (x half)
        pl.BlockSpec((y_dim, hp), full_map),                 # W1 (y half)
        pl.BlockSpec((1, hp), full_map),                     # b1
        pl.BlockSpec((hp, hp), full_map),                    # W2
        pl.BlockSpec((1, hp), full_map),                     # b2
        pl.BlockSpec((hp, hp), full_map),                    # W3
        pl.BlockSpec((1, hp), full_map),                     # b3
        pl.BlockSpec((hp, hp), full_map),                    # W4
        pl.BlockSpec((1, hp), full_map),                     # b4
        pl.BlockSpec((1, hp), full_map),                     # Wo (as a row)
        pl.BlockSpec(memory_space=pltpu.MemorySpace.SMEM),   # bo scalar
    ]
    # Lane-dense output: one (1, 1, tile) row per grid step; the last two
    # block dims fully cover the array dims so stores are unmasked vst.
    out_specs = pl.BlockSpec((1, 1, tile), lambda i: (i, 0, 0))

    out = pl.pallas_call(
        _critic_kernel,
        out_shape=jax.ShapeDtypeStruct((n_tiles, 1, tile), jnp.float32),
        grid=(n_tiles,),
        in_specs=in_specs,
        out_specs=out_specs,
        compiler_params=pltpu.CompilerParams(
            dimension_semantics=("parallel",)),
    )(x, y, w1x, w1y, b1, w2, b2, w3, b3, w4, b4, wo_row, bo)

    # (n_tiles, 1, tile) -> (B, 1); row-major order matches batch order.
    return out.reshape(B_pad, 1)[:B]


def init_params(key, y_dim, hidden_dim, n_layers=3):
    """Deterministic init mimicking nn.Linear's U(-1/sqrt(fan_in), 1/sqrt(fan_in))."""
    dims = [(2 * y_dim, hidden_dim)] \
         + [(hidden_dim, hidden_dim)] * n_layers \
         + [(hidden_dim, 1)]
    params = []
    for (fan_in, fan_out) in dims:
        key, kw, kb = jax.random.split(key, 3)
        bound = 1.0 / jnp.sqrt(fan_in)
        w = jax.random.uniform(kw, (fan_in, fan_out), jnp.float32, -bound, bound)
        b = jax.random.uniform(kb, (1, fan_out), jnp.float32, -bound, bound)
        params.append((w, b))
    return params


def reference_forward(x, y, params):
    h = jnp.concatenate([x, y], axis=1).astype(jnp.float32)
    (w1, b1), (w2, b2), (w3, b3), (w4, b4), (wo, bo) = params
    h = jnp.maximum(h @ w1 + b1, 0.0)
    for w, b in ((w2, b2), (w3, b3), (w4, b4)):
        h = h @ w + b
        h = jnp.where(h > 0.0, h, 0.01 * h)
    return h @ wo + bo


if __name__ == "__main__":
    y_dim = 4
    hidden_dim = 32
    n_layers = 3
    batch = 16

    key = jax.random.PRNGKey(0)
    kx, ky, kp = jax.random.split(key, 3)
    x = jax.random.normal(kx, (batch, y_dim), jnp.float32)
    y = jax.random.normal(ky, (batch, y_dim), jnp.float32)
    params = init_params(kp, y_dim, hidden_dim, n_layers)

    out = jax.jit(smart_critic_forward)(x, y, params)
    out = jax.block_until_ready(out)

    ref = reference_forward(x, y, params)
    assert out.shape == (batch, 1)
    assert jnp.allclose(out, ref, atol=1e-5, rtol=1e-5)

    print("KERNEL_OK")
</pallas_src>

<mosaic_0001>
module attributes {stable_mosaic.version = 11 : i64} {
  func.func @_critic_kernel(%arg0: i32, %arg1: memref<16x4xf32, #tpu.memory_space<vmem>>, %arg2: memref<16x4xf32, #tpu.memory_space<vmem>>, %arg3: memref<4x128xf32, #tpu.memory_space<vmem>>, %arg4: memref<4x128xf32, #tpu.memory_space<vmem>>, %arg5: memref<1x128xf32, #tpu.memory_space<vmem>>, %arg6: memref<128x128xf32, #tpu.memory_space<vmem>>, %arg7: memref<1x128xf32, #tpu.memory_space<vmem>>, %arg8: memref<128x128xf32, #tpu.memory_space<vmem>>, %arg9: memref<1x128xf32, #tpu.memory_space<vmem>>, %arg10: memref<128x128xf32, #tpu.memory_space<vmem>>, %arg11: memref<1x128xf32, #tpu.memory_space<vmem>>, %arg12: memref<1x128xf32, #tpu.memory_space<vmem>>, %arg13: memref<1xf32, #tpu.memory_space<smem>>, %arg14: memref<1x1x16xf32, #tpu.memory_space<vmem>>) attributes {dimension_semantics = [#tpu.dimension_semantics<parallel>], iteration_bounds = array<i64: 1>, scalar_prefetch = 0 : i64, scratch_operands = 0 : i64, tpu.core_type = #tpu.core_type<tc>, window_params = [{transform_indices = @transform_0, window_bounds = array<i64: 16, 4>}, {transform_indices = @transform_1, window_bounds = array<i64: 16, 4>}, {pipeline_mode = #tpu.pipeline_mode<synchronous>, transform_indices = @transform_2, window_bounds = array<i64: 4, 128>}, {pipeline_mode = #tpu.pipeline_mode<synchronous>, transform_indices = @transform_3, window_bounds = array<i64: 4, 128>}, {pipeline_mode = #tpu.pipeline_mode<synchronous>, transform_indices = @transform_4, window_bounds = array<i64: 1, 128>}, {pipeline_mode = #tpu.pipeline_mode<synchronous>, transform_indices = @transform_5, window_bounds = array<i64: 128, 128>}, {pipeline_mode = #tpu.pipeline_mode<synchronous>, transform_indices = @transform_6, window_bounds = array<i64: 1, 128>}, {pipeline_mode = #tpu.pipeline_mode<synchronous>, transform_indices = @transform_7, window_bounds = array<i64: 128, 128>}, {pipeline_mode = #tpu.pipeline_mode<synchronous>, transform_indices = @transform_8, window_bounds = array<i64: 1, 128>}, {pipeline_mode = #tpu.pipeline_mode<synchronous>, transform_indices = @transform_9, window_bounds = array<i64: 128, 128>}, {pipeline_mode = #tpu.pipeline_mode<synchronous>, transform_indices = @transform_10, window_bounds = array<i64: 1, 128>}, {pipeline_mode = #tpu.pipeline_mode<synchronous>, transform_indices = @transform_11, window_bounds = array<i64: 1, 128>}, {transform_indices = @transform_12, window_bounds = array<i64: 1>}, {transform_indices = @transform_13, window_bounds = array<i64: 1, 1, 16>}]} {
    %c0 = arith.constant 0 : index
    %c0_0 = arith.constant 0 : index
    %0 = vector.load %arg1[%c0, %c0_0] : memref<16x4xf32, #tpu.memory_space<vmem>>, vector<16x4xf32>
    %c0_1 = arith.constant 0 : index
    %c0_2 = arith.constant 0 : index
    %1 = vector.load %arg3[%c0_1, %c0_2] : memref<4x128xf32, #tpu.memory_space<vmem>>, vector<4x128xf32>
    %cst = arith.constant dense<0.000000e+00> : vector<16x128xf32>
    %2 = tpu.matmul %0, %1, %cst {dimension_numbers = #tpu.dot_dimension_numbers<[1], [0], [0], [1], [0, 0, 1, 1], [], []>} : vector<16x4xf32>, vector<4x128xf32>, vector<16x128xf32> -> vector<16x128xf32>
    %c0_3 = arith.constant 0 : index
    %c0_4 = arith.constant 0 : index
    %3 = vector.load %arg2[%c0_3, %c0_4] : memref<16x4xf32, #tpu.memory_space<vmem>>, vector<16x4xf32>
    %c0_5 = arith.constant 0 : index
    %c0_6 = arith.constant 0 : index
    %4 = vector.load %arg4[%c0_5, %c0_6] : memref<4x128xf32, #tpu.memory_space<vmem>>, vector<4x128xf32>
    %cst_7 = arith.constant dense<0.000000e+00> : vector<16x128xf32>
    %5 = tpu.matmul %3, %4, %cst_7 {dimension_numbers = #tpu.dot_dimension_numbers<[1], [0], [0], [1], [0, 0, 1, 1], [], []>} : vector<16x4xf32>, vector<4x128xf32>, vector<16x128xf32> -> vector<16x128xf32>
    %6 = arith.addf %2, %5 : vector<16x128xf32>
    %c0_8 = arith.constant 0 : index
    %c0_9 = arith.constant 0 : index
    %7 = vector.load %arg5[%c0_8, %c0_9] : memref<1x128xf32, #tpu.memory_space<vmem>>, vector<1x128xf32>
    %8 = vector.broadcast %7 : vector<1x128xf32> to vector<16x128xf32>
    %9 = arith.addf %6, %8 : vector<16x128xf32>
    %cst_10 = arith.constant 0.000000e+00 : f32
    %10 = vector.broadcast %cst_10 : f32 to vector<16x128xf32>
    %11 = arith.maximumf %9, %10 : vector<16x128xf32>
    %c0_11 = arith.constant 0 : index
    %c0_12 = arith.constant 0 : index
    %12 = vector.load %arg6[%c0_11, %c0_12] : memref<128x128xf32, #tpu.memory_space<vmem>>, vector<128x128xf32>
    %cst_13 = arith.constant dense<0.000000e+00> : vector<16x128xf32>
    %13 = tpu.matmul %11, %12, %cst_13 {dimension_numbers = #tpu.dot_dimension_numbers<[1], [0], [0], [1], [0, 0, 1, 1], [], []>} : vector<16x128xf32>, vector<128x128xf32>, vector<16x128xf32> -> vector<16x128xf32>
    %c0_14 = arith.constant 0 : index
    %c0_15 = arith.constant 0 : index
    %14 = vector.load %arg7[%c0_14, %c0_15] : memref<1x128xf32, #tpu.memory_space<vmem>>, vector<1x128xf32>
    %15 = vector.broadcast %14 : vector<1x128xf32> to vector<16x128xf32>
    %16 = arith.addf %13, %15 : vector<16x128xf32>
    %cst_16 = arith.constant 0.000000e+00 : f32
    %17 = vector.broadcast %cst_16 : f32 to vector<16x128xf32>
    %18 = arith.cmpf ogt, %16, %17 : vector<16x128xf32>
    %cst_17 = arith.constant 0.00999999977 : f32
    %19 = vector.broadcast %cst_17 : f32 to vector<16x128xf32>
    %20 = arith.mulf %19, %16 : vector<16x128xf32>
    %21 = arith.select %18, %16, %20 : vector<16x128xi1>, vector<16x128xf32>
    %c0_18 = arith.constant 0 : index
    %c0_19 = arith.constant 0 : index
    %22 = vector.load %arg8[%c0_18, %c0_19] : memref<128x128xf32, #tpu.memory_space<vmem>>, vector<128x128xf32>
    %cst_20 = arith.constant dense<0.000000e+00> : vector<16x128xf32>
    %23 = tpu.matmul %21, %22, %cst_20 {dimension_numbers = #tpu.dot_dimension_numbers<[1], [0], [0], [1], [0, 0, 1, 1], [], []>} : vector<16x128xf32>, vector<128x128xf32>, vector<16x128xf32> -> vector<16x128xf32>
    %c0_21 = arith.constant 0 : index
    %c0_22 = arith.constant 0 : index
    %24 = vector.load %arg9[%c0_21, %c0_22] : memref<1x128xf32, #tpu.memory_space<vmem>>, vector<1x128xf32>
    %25 = vector.broadcast %24 : vector<1x128xf32> to vector<16x128xf32>
    %26 = arith.addf %23, %25 : vector<16x128xf32>
    %cst_23 = arith.constant 0.000000e+00 : f32
    %27 = vector.broadcast %cst_23 : f32 to vector<16x128xf32>
    %28 = arith.cmpf ogt, %26, %27 : vector<16x128xf32>
    %cst_24 = arith.constant 0.00999999977 : f32
    %29 = vector.broadcast %cst_24 : f32 to vector<16x128xf32>
    %30 = arith.mulf %29, %26 : vector<16x128xf32>
    %31 = arith.select %28, %26, %30 : vector<16x128xi1>, vector<16x128xf32>
    %c0_25 = arith.constant 0 : index
    %c0_26 = arith.constant 0 : index
    %32 = vector.load %arg10[%c0_25, %c0_26] : memref<128x128xf32, #tpu.memory_space<vmem>>, vector<128x128xf32>
    %cst_27 = arith.constant dense<0.000000e+00> : vector<16x128xf32>
    %33 = tpu.matmul %31, %32, %cst_27 {dimension_numbers = #tpu.dot_dimension_numbers<[1], [0], [0], [1], [0, 0, 1, 1], [], []>} : vector<16x128xf32>, vector<128x128xf32>, vector<16x128xf32> -> vector<16x128xf32>
    %c0_28 = arith.constant 0 : index
    %c0_29 = arith.constant 0 : index
    %34 = vector.load %arg11[%c0_28, %c0_29] : memref<1x128xf32, #tpu.memory_space<vmem>>, vector<1x128xf32>
    %35 = vector.broadcast %34 : vector<1x128xf32> to vector<16x128xf32>
    %36 = arith.addf %33, %35 : vector<16x128xf32>
    %cst_30 = arith.constant 0.000000e+00 : f32
    %37 = vector.broadcast %cst_30 : f32 to vector<16x128xf32>
    %38 = arith.cmpf ogt, %36, %37 : vector<16x128xf32>
    %cst_31 = arith.constant 0.00999999977 : f32
    %39 = vector.broadcast %cst_31 : f32 to vector<16x128xf32>
    %40 = arith.mulf %39, %36 : vector<16x128xf32>
    %41 = arith.select %38, %36, %40 : vector<16x128xi1>, vector<16x128xf32>
    %c0_32 = arith.constant 0 : index
    %c0_33 = arith.constant 0 : index
    %42 = vector.load %arg12[%c0_32, %c0_33] : memref<1x128xf32, #tpu.memory_space<vmem>>, vector<1x128xf32>
    %cst_34 = arith.constant dense<0.000000e+00> : vector<1x16xf32>
    %43 = tpu.matmul %42, %41, %cst_34 {dimension_numbers = #tpu.dot_dimension_numbers<[1], [1], [0], [0], [0, 0, 1, 0], [], []>} : vector<1x128xf32>, vector<16x128xf32>, vector<1x16xf32> -> vector<1x16xf32>
    %c0_35 = arith.constant 0 : index
    %44 = memref.load %arg13[%c0_35] : memref<1xf32, #tpu.memory_space<smem>>
    %45 = vector.broadcast %44 : f32 to vector<1x16xf32>
    %46 = arith.addf %43, %45 : vector<1x16xf32>
    %c0_36 = arith.constant 0 : index
    %c0_37 = arith.constant 0 : index
    %c0_38 = arith.constant 0 : index
    %47 = vector.load %arg14[%c0_36, %c0_37, %c0_38] : memref<1x1x16xf32, #tpu.memory_space<vmem>>, vector<1x1x16xf32>
    %48 = vector.shape_cast %47 : vector<1x1x16xf32> to vector<1x16xf32>
    %49 = vector.shape_cast %46 : vector<1x16xf32> to vector<1x1x16xf32>
    tpu.vector_store %arg14[%c0_36, %c0_37, %c0_38], %49 {strides = array<i32>} : memref<1x1x16xf32, #tpu.memory_space<vmem>>, vector<1x1x16xf32>,
    return
  }
  func.func @transform_0(%arg0: i32) -> (i32, i32) {
    %c0_i32 = arith.constant 0 : i32
    %c0_i32_0 = arith.constant 0 : i32
    return %arg0, %c0_i32 : i32, i32
  }
  func.func @transform_1(%arg0: i32) -> (i32, i32) {
    %c0_i32 = arith.constant 0 : i32
    %c0_i32_0 = arith.constant 0 : i32
    return %arg0, %c0_i32 : i32, i32
  }
  func.func @transform_2(%arg0: i32) -> (i32, i32) {
    %c0_i32 = arith.constant 0 : i32
    %c0_i32_0 = arith.constant 0 : i32
    %c0_i32_1 = arith.constant 0 : i32
    return %c0_i32, %c0_i32_0 : i32, i32
  }
  func.func @transform_3(%arg0: i32) -> (i32, i32) {
    %c0_i32 = arith.constant 0 : i32
    %c0_i32_0 = arith.constant 0 : i32
    %c0_i32_1 = arith.constant 0 : i32
    return %c0_i32, %c0_i32_0 : i32, i32
  }
  func.func @transform_4(%arg0: i32) -> (i32, i32) {
    %c0_i32 = arith.constant 0 : i32
    %c0_i32_0 = arith.constant 0 : i32
    %c0_i32_1 = arith.constant 0 : i32
    return %c0_i32, %c0_i32_0 : i32, i32
  }
  func.func @transform_5(%arg0: i32) -> (i32, i32) {
    %c0_i32 = arith.constant 0 : i32
    %c0_i32_0 = arith.constant 0 : i32
    %c0_i32_1 = arith.constant 0 : i32
    return %c0_i32, %c0_i32_0 : i32, i32
  }
  func.func @transform_6(%arg0: i32) -> (i32, i32) {
    %c0_i32 = arith.constant 0 : i32
    %c0_i32_0 = arith.constant 0 : i32
    %c0_i32_1 = arith.constant 0 : i32
    return %c0_i32, %c0_i32_0 : i32, i32
  }
  func.func @transform_7(%arg0: i32) -> (i32, i32) {
    %c0_i32 = arith.constant 0 : i32
    %c0_i32_0 = arith.constant 0 : i32
    %c0_i32_1 = arith.constant 0 : i32
    return %c0_i32, %c0_i32_0 : i32, i32
  }
  func.func @transform_8(%arg0: i32) -> (i32, i32) {
    %c0_i32 = arith.constant 0 : i32
    %c0_i32_0 = arith.constant 0 : i32
    %c0_i32_1 = arith.constant 0 : i32
    return %c0_i32, %c0_i32_0 : i32, i32
  }
  func.func @transform_9(%arg0: i32) -> (i32, i32) {
    %c0_i32 = arith.constant 0 : i32
    %c0_i32_0 = arith.constant 0 : i32
    %c0_i32_1 = arith.constant 0 : i32
    return %c0_i32, %c0_i32_0 : i32, i32
  }
  func.func @transform_10(%arg0: i32) -> (i32, i32) {
    %c0_i32 = arith.constant 0 : i32
    %c0_i32_0 = arith.constant 0 : i32
    %c0_i32_1 = arith.constant 0 : i32
    return %c0_i32, %c0_i32_0 : i32, i32
  }
  func.func @transform_11(%arg0: i32) -> (i32, i32) {
    %c0_i32 = arith.constant 0 : i32
    %c0_i32_0 = arith.constant 0 : i32
    %c0_i32_1 = arith.constant 0 : i32
    return %c0_i32, %c0_i32_0 : i32, i32
  }
  func.func @transform_12(%arg0: i32) -> i32 {
    %c0_i32 = arith.constant 0 : i32
    %c0_i32_0 = arith.constant 0 : i32
    return %c0_i32 : i32
  }
  func.func @transform_13(%arg0: i32) -> (i32, i32, i32) {
    %c0_i32 = arith.constant 0 : i32
    %c0_i32_0 = arith.constant 0 : i32
    %c0_i32_1 = arith.constant 0 : i32
    return %arg0, %c0_i32, %c0_i32_0 : i32, i32, i32
  }
}

</mosaic_0001>

<llo_original>
// kernel: smart_critic_forward.1
$region0: #{smart_critic_forward.1}
  #allocation0 [shape = 'u32[]', space=smem, size = 0x4, offset = 0x4, fixed_abs, tag = 'smem constant byte address 0x4 - core index']
  #allocation1 [shape = 'u32[144,128]{1,0:T(1,128)}', space=vmem, size = 0x12000, scoped, tag = 'internal scratch']
  #allocation2 [shape = 'f32[1]{0:T(128)S(6)}', space=smem, size = 0x200, scoped, tag = 'scoped memory for smart_critic_forward.1']
  %s0 = inlined_call_operand.vmem [shape: f32[16,4], index: 0, kind: input, shape index: {}]
  %s1 = inlined_call_operand.vmem [shape: f32[16,4], index: 1, kind: input, shape index: {}]
  %s2 = inlined_call_operand.vmem [shape: f32[4,128], index: 2, kind: input, shape index: {}]
  %s3 = inlined_call_operand.vmem [shape: f32[4,128], index: 3, kind: input, shape index: {}]
  %s4 = inlined_call_operand.vmem [shape: f32[1,128], index: 4, kind: input, shape index: {}]
  %s5 = inlined_call_operand.vmem [shape: f32[128,128], index: 5, kind: input, shape index: {}]
  %s6 = inlined_call_operand.vmem [shape: f32[1,128], index: 6, kind: input, shape index: {}]
  %s7 = inlined_call_operand.vmem [shape: f32[128,128], index: 7, kind: input, shape index: {}]
  %s8 = inlined_call_operand.vmem [shape: f32[1,128], index: 8, kind: input, shape index: {}]
  %s9 = inlined_call_operand.vmem [shape: f32[128,128], index: 9, kind: input, shape index: {}]
  %s10 = inlined_call_operand.vmem [shape: f32[1,128], index: 10, kind: input, shape index: {}]
  %s11 = inlined_call_operand.vmem [shape: f32[1,128], index: 11, kind: input, shape index: {}]
  %s12 = inlined_call_operand.<no memory space> [shape: f32[1], index: 12, kind: input, shape index: {}]
  %s13 = inlined_call_operand.hbm [shape: f32[1,1,16], index: 13, kind: output, shape index: {}]
  %s14 = sld [smem:[#allocation0]]
  $region62: #{smart_critic_forward.1} parent=0
    _
  %s16 = ssub.s32 1, %s14
  %s17 = scalar_select 0, %s16, %s14
  %18 = sst [smem:[#allocation2]] %s12
  $region1: #{smart_critic_forward.1} parent=0
    #allocation3 [shape = 'u8[512]{0}', space=vmem, size = 0x400, scoped, tag = 'output window, operand 0, single buffered']
    #allocation4 [shape = 's32[1]{0}', space=sflag, size = 0x4, scoped, tag = 'scoped memory for smart_critic_forward.1']
    %19 = vsyncpa [#allocation4], 0
    // Predicated region
    $region2: #{smart_critic_forward.1} parent=1 // pred_check
      _
    $region3: #{smart_critic_forward.1} parent=1 // pred_check_branch
      %21 = sbr.rel (0) target = $region5
    $region4: #{smart_critic_forward.1} parent=1 // pred_region
      _
    $region5: #{smart_critic_forward.1} parent=1 // pred_fallthru
      _
    // Predicated region
    $region6: #{smart_critic_forward.1} parent=1 // pred_check
      _
    $region7: #{smart_critic_forward.1} parent=1 // pred_check_branch
      %23 = sbr.rel (0) target = $region9
    $region8: #{smart_critic_forward.1} parent=1 // pred_region
      _
    $region9: #{smart_critic_forward.1} parent=1 // pred_fallthru
      _
    // Predicated region
    $region10: #{smart_critic_forward.1} parent=1 // pred_check
      _
    $region11: #{smart_critic_forward.1} parent=1 // pred_check_branch
      %25 = sbr.rel (0) target = $region13
    $region12: #{smart_critic_forward.1} parent=1 // pred_region
      _
    $region13: #{smart_critic_forward.1} parent=1 // pred_fallthru
      _
    // Predicated region
    $region14: #{smart_critic_forward.1} parent=1 // pred_check
      _
    $region15: #{smart_critic_forward.1} parent=1 // pred_check_branch
      %27 = sbr.rel (0) target = $region17
    $region16: #{smart_critic_forward.1} parent=1 // pred_region
      _
    $region17: #{smart_critic_forward.1} parent=1 // pred_fallthru
      _
    // Predicated region
    $region18: #{smart_critic_forward.1} parent=1 // pred_check
      _
    $region19: #{smart_critic_forward.1} parent=1 // pred_check_branch
      %29 = sbr.rel (0) target = $region21
    $region20: #{smart_critic_forward.1} parent=1 // pred_region
      _
    $region21: #{smart_critic_forward.1} parent=1 // pred_fallthru
      _
    // Predicated region
    $region22: #{smart_critic_forward.1} parent=1 // pred_check
      _
    $region23: #{smart_critic_forward.1} parent=1 // pred_check_branch
      %31 = sbr.rel (0) target = $region25
    $region24: #{smart_critic_forward.1} parent=1 // pred_region
      _
    $region25: #{smart_critic_forward.1} parent=1 // pred_fallthru
      _
    // Predicated region
    $region26: #{smart_critic_forward.1} parent=1 // pred_check
      _
    $region27: #{smart_critic_forward.1} parent=1 // pred_check_branch
      %33 = sbr.rel (0) target = $region29
    $region28: #{smart_critic_forward.1} parent=1 // pred_region
      _
    $region29: #{smart_critic_forward.1} parent=1 // pred_fallthru
      _
    // Predicated region
    $region30: #{smart_critic_forward.1} parent=1 // pred_check
      _
    $region31: #{smart_critic_forward.1} parent=1 // pred_check_branch
      %35 = sbr.rel (0) target = $region33
    $region32: #{smart_critic_forward.1} parent=1 // pred_region
      _
    $region33: #{smart_critic_forward.1} parent=1 // pred_fallthru
      _
    // Predicated region
    $region34: #{smart_critic_forward.1} parent=1 // pred_check
      _
    $region35: #{smart_critic_forward.1} parent=1 // pred_check_branch
      %37 = sbr.rel (0) target = $region37
    $region36: #{smart_critic_forward.1} parent=1 // pred_region
      _
    $region37: #{smart_critic_forward.1} parent=1 // pred_fallthru
      _
    // Predicated region
    $region38: #{smart_critic_forward.1} parent=1 // pred_check
      _
    $region39: #{smart_critic_forward.1} parent=1 // pred_check_branch
      %39 = sbr.rel (0) target = $region41
    $region40: #{smart_critic_forward.1} parent=1 // pred_region
      _
    $region41: #{smart_critic_forward.1} parent=1 // pred_fallthru
      _
    // Predicated region
    $region42: #{smart_critic_forward.1} parent=1 // pred_check
      _
    $region43: #{smart_critic_forward.1} parent=1 // pred_check_branch
      %41 = sbr.rel (0) target = $region45
    $region44: #{smart_critic_forward.1} parent=1 // pred_region
      _
    $region45: #{smart_critic_forward.1} parent=1 // pred_fallthru
      _
    // Predicated region
    $region46: #{smart_critic_forward.1} parent=1 // pred_check
      _
    $region47: #{smart_critic_forward.1} parent=1 // pred_check_branch
      %43 = sbr.rel (0) target = $region49
    $region48: #{smart_critic_forward.1} parent=1 // pred_region
      _
    $region49: #{smart_critic_forward.1} parent=1 // pred_fallthru
      _
    // Predicated region
    $region50: #{smart_critic_forward.1} parent=1 // pred_check
      _
    $region51: #{smart_critic_forward.1} parent=1 // pred_check_branch
      %45 = sbr.rel (0) target = $region53
    $region52: #{smart_critic_forward.1} parent=1 // pred_region
      _
    $region53: #{smart_critic_forward.1} parent=1 // pred_fallthru
      _
    %v46 = vld [vmem:[%s0] sm:$0xff]
    %v47 = vld [vmem:[%s0 + $0x8] sm:$0xff]
    %v48 = vld [vmem:[%s2] sm:$0xf]
    %v49 = vld [vmem:[%s1] sm:$0xff]
    %v50 = vld [vmem:[%s1 + $0x8] sm:$0xff]
    %v51 = vld [vmem:[%s3] sm:$0xf]
    %vm52 = vcmask 31744
    %v54 = vsel %vm52, %v49, 0
    %v57 = vsel %vm52, %v50, 0
    %vm59 = vcmask 1043456
    %v61 = vsel %vm59, %v51, 0
    %63 = vmatprep.subr.mxu0 0.0
    %64 = vmatpush1.msra.mxu0 %v61
    %65 = vmatprep.subr.mxu0 0.0
    %66 = vmatpush1.msra.mxu0 0.0
    %67 = vmatprep.subr.mxu0 0.0
    %68 = vmatpush1.msra.mxu0 0.0
    %69 = vmatprep.subr.mxu0 0.0
    %70 = vmatpush1.msra.mxu0 0.0
    %71 = vmatprep.subr.mxu0 0.0
    %72 = vmatpush1.msra.mxu0 0.0
    %73 = vmatprep.subr.mxu0 0.0
    %74 = vmatpush1.msra.mxu0 0.0
    %75 = vmatprep.subr.mxu0 0.0
    %76 = vmatpush1.msra.mxu0 0.0
    %77 = vmatprep.subr.mxu0 0.0
    %78 = vmatpush1.msra.mxu0 0.0
    %79 = vmatprep.subr.mxu0 0.0
    %80 = vmatpush1.msra.mxu0 0.0
    %81 = vmatprep.subr.mxu0 0.0
    %82 = vmatpush1.msra.mxu0 0.0
    %83 = vmatprep.subr.mxu0 0.0
    %84 = vmatpush1.msra.mxu0 0.0
    %85 = vmatprep.subr.mxu0 0.0
    %86 = vmatpush1.msra.mxu0 0.0
    %87 = vmatprep.subr.mxu0 0.0
    %88 = vmatpush1.msra.mxu0 0.0
    %89 = vmatprep.subr.mxu0 0.0
    %90 = vmatpush1.msra.mxu0 0.0
    %91 = vmatprep.subr.mxu0 0.0
    %92 = vmatpush1.msra.mxu0 0.0
    %93 = vmatprep.subr.mxu0 0.0
    %94 = vmatpush1.msra.mxu0 0.0
    %95 = vmatprep.subr.mxu0 0.0
    %96 = vmatpush1.msra.mxu0 0.0
    %97 = vmatprep.subr.mxu0 0.0
    %98 = vmatpush1.msra.mxu0 0.0
    %99 = vmatprep.subr.mxu0 0.0
    %100 = vmatpush1.msra.mxu0 0.0
    %101 = vmatprep.subr.mxu0 0.0
    %102 = vmatpush1.msra.mxu0 0.0
    %103 = vmatprep.subr.mxu0 0.0
    %104 = vmatpush1.msra.mxu0 0.0
    %105 = vmatprep.subr.mxu0 0.0
    %106 = vmatpush1.msra.mxu0 0.0
    %107 = vmatprep.subr.mxu0 0.0
    %108 = vmatpush1.msra.mxu0 0.0
    %109 = vmatprep.subr.mxu0 0.0
    %110 = vmatpush1.msra.mxu0 0.0
    %111 = vmatprep.subr.mxu0 0.0
    %112 = vmatpush1.msra.mxu0 0.0
    %113 = vmatprep.subr.mxu0 0.0
    %114 = vmatpush1.msra.mxu0 0.0
    %115 = vmatprep.subr.mxu0 0.0
    %116 = vmatpush1.msra.mxu0 0.0
    %117 = vmatprep.subr.mxu0 0.0
    %118 = vmatpush1.msra.mxu0 0.0
    %119 = vmatprep.subr.mxu0 0.0
    %120 = vmatpush1.msra.mxu0 0.0
    %121 = vmatprep.subr.mxu0 0.0
    %122 = vmatpush1.msra.mxu0 0.0
    %123 = vmatprep.subr.mxu0 0.0
    %124 = vmatpush1.msra.mxu0 0.0
    %125 = vmatprep.subr.mxu0 0.0
    %126 = vmatpush1.msra.mxu0 0.0
    %127 = vmatprep.mubr.f32.mxu0 0.0
    %128 = vmatmul.mubr.f32.gmra.mrb[0].mxu0 %v54
    %v129 = vpop.f32.mrb[0].mxu0
    %v130 = vadd.f32 0.0, %v129
    %v131 = vpop.f32.mrb[0].mxu0
    %132 = vmatprep.mubr.f32.mxu0 0.0
    %133 = vmatmul.mubr.f32.gmra.mrb[0].mxu0 %v57
    %v134 = vpop.f32.mrb[0].mxu0
    %v135 = vadd.f32 0.0, %v134
    %v136 = vpop.f32.mrb[0].mxu0
    %137 = vdwg.mxu0
    %v139 = vsel %vm52, %v46, 0
    %v142 = vsel %vm52, %v47, 0
    %v145 = vsel %vm59, %v48, 0
    %147 = vmatprep.subr.mxu0 0.0
    %148 = vmatpush1.msra.mxu0 %v145
    %149 = vmatprep.subr.mxu0 0.0
    %150 = vmatpush1.msra.mxu0 0.0
    %151 = vmatprep.subr.mxu0 0.0
    %152 = vmatpush1.msra.mxu0 0.0
    %153 = vmatprep.subr.mxu0 0.0
    %154 = vmatpush1.msra.mxu0 0.0
    %155 = vmatprep.subr.mxu0 0.0
    %156 = vmatpush1.msra.mxu0 0.0
    %157 = vmatprep.subr.mxu0 0.0
    %158 = vmatpush1.msra.mxu0 0.0
    %159 = vmatprep.subr.mxu0 0.0
    %160 = vmatpush1.msra.mxu0 0.0
    %161 = vmatprep.subr.mxu0 0.0
    %162 = vmatpush1.msra.mxu0 0.0
    %163 = vmatprep.subr.mxu0 0.0
    %164 = vmatpush1.msra.mxu0 0.0
    %165 = vmatprep.subr.mxu0 0.0
    %166 = vmatpush1.msra.mxu0 0.0
    %167 = vmatprep.subr.mxu0 0.0
    %168 = vmatpush1.msra.mxu0 0.0
    %169 = vmatprep.subr.mxu0 0.0
    %170 = vmatpush1.msra.mxu0 0.0
    %171 = vmatprep.subr.mxu0 0.0
    %172 = vmatpush1.msra.mxu0 0.0
    %173 = vmatprep.subr.mxu0 0.0
    %174 = vmatpush1.msra.mxu0 0.0
    %175 = vmatprep.subr.mxu0 0.0
    %176 = vmatpush1.msra.mxu0 0.0
    %177 = vmatprep.subr.mxu0 0.0
    %178 = vmatpush1.msra.mxu0 0.0
    %179 = vmatprep.subr.mxu0 0.0
    %180 = vmatpush1.msra.mxu0 0.0
    %181 = vmatprep.subr.mxu0 0.0
    %182 = vmatpush1.msra.mxu0 0.0
    %183 = vmatprep.subr.mxu0 0.0
    %184 = vmatpush1.msra.mxu0 0.0
    %185 = vmatprep.subr.mxu0 0.0
    %186 = vmatpush1.msra.mxu0 0.0
    %187 = vmatprep.subr.mxu0 0.0
    %188 = vmatpush1.msra.mxu0 0.0
    %189 = vmatprep.subr.mxu0 0.0
    %190 = vmatpush1.msra.mxu0 0.0
    %191 = vmatprep.subr.mxu0 0.0
    %192 = vmatpush1.msra.mxu0 0.0
    %193 = vmatprep.subr.mxu0 0.0
    %194 = vmatpush1.msra.mxu0 0.0
    %195 = vmatprep.subr.mxu0 0.0
    %196 = vmatpush1.msra.mxu0 0.0
    %197 = vmatprep.subr.mxu0 0.0
    %198 = vmatpush1.msra.mxu0 0.0
    %199 = vmatprep.subr.mxu0 0.0
    %200 = vmatpush1.msra.mxu0 0.0
    %201 = vmatprep.subr.mxu0 0.0
    %202 = vmatpush1.msra.mxu0 0.0
    %203 = vmatprep.subr.mxu0 0.0
    %204 = vmatpush1.msra.mxu0 0.0
    %205 = vmatprep.subr.mxu0 0.0
    %206 = vmatpush1.msra.mxu0 0.0
    %207 = vmatprep.subr.mxu0 0.0
    %208 = vmatpush1.msra.mxu0 0.0
    %209 = vmatprep.subr.mxu0 0.0
    %210 = vmatpush1.msra.mxu0 0.0
    %211 = vmatprep.mubr.f32.mxu0 0.0
    %212 = vmatmul.mubr.f32.gmra.mrb[0].mxu0 %v139
    %v213 = vpop.f32.mrb[0].mxu0
    %v214 = vadd.f32 %v130, %v213
    %v215 = vpop.f32.mrb[0].mxu0
    %216 = vmatprep.mubr.f32.mxu0 0.0
    %217 = vmatmul.mubr.f32.gmra.mrb[0].mxu0 %v142
    %v218 = vpop.f32.mrb[0].mxu0
    %v219 = vadd.f32 %v135, %v218
    %v220 = vpop.f32.mrb[0].mxu0
    %221 = vdwg.mxu0
    %v222 = vld [vmem:[%s4] sm:$0x1]
    %v224 = vlaneseq
    %v225 = vshrl.u32 %v224, 7
    %v226 = vsub.s32 0, %v225
    %v227 = vrot.slane %v222, %v226
    %v229 = vadd.f32 %v214, %v227
    %v230 = vadd.f32 %v219, %v227
    %v231 = vmax.f32 %v229, 0.0
    %v232 = vmax.f32 %v230, 0.0
    %v233 = vld [vmem:[%s5] sm:$0xff]
    %v234 = vld [vmem:[%s5 + $0x8] sm:$0xff]
    %v235 = vld [vmem:[%s5 + $0x10] sm:$0xff]
    %v236 = vld [vmem:[%s5 + $0x18] sm:$0xff]
    %v237 = vld [vmem:[%s5 + $0x20] sm:$0xff]
    %v238 = vld [vmem:[%s5 + $0x28] sm:$0xff]
    %v239 = vld [vmem:[%s5 + $0x30] sm:$0xff]
    %v240 = vld [vmem:[%s5 + $0x38] sm:$0xff]
    %v241 = vld [vmem:[%s5 + $0x40] sm:$0xff]
    %v242 = vld [vmem:[%s5 + $0x48] sm:$0xff]
    %v243 = vld [vmem:[%s5 + $0x50] sm:$0xff]
    %v244 = vld [vmem:[%s5 + $0x58] sm:$0xff]
    %v245 = vld [vmem:[%s5 + $0x60] sm:$0xff]
    %v246 = vld [vmem:[%s5 + $0x68] sm:$0xff]
    %v247 = vld [vmem:[%s5 + $0x70] sm:$0xff]
    %v248 = vld [vmem:[%s5 + $0x78] sm:$0xff]
    %v249 = vld [vmem:[%s6] sm:$0x1]
    %v251 = vlaneseq
    %v252 = vshrl.u32 %v251, 7
    %v253 = vsub.s32 0, %v252
    %v254 = vrot.slane %v249, %v253
    %256 = vmatprep.subr.mxu0 0.0
    %257 = vmatpush1.msra.mxu0 %v233
    %258 = vmatprep.subr.mxu0 0.0
    %259 = vmatpush1.msra.mxu0 %v234
    %260 = vmatprep.subr.mxu0 0.0
    %261 = vmatpush1.msra.mxu0 %v235
    %262 = vmatprep.subr.mxu0 0.0
    %263 = vmatpush1.msra.mxu0 %v236
    %264 = vmatprep.subr.mxu0 0.0
    %265 = vmatpush1.msra.mxu0 %v237
    %266 = vmatprep.subr.mxu0 0.0
    %267 = vmatpush1.msra.mxu0 %v238
    %268 = vmatprep.subr.mxu0 0.0
    %269 = vmatpush1.msra.mxu0 %v239
    %270 = vmatprep.subr.mxu0 0.0
    %271 = vmatpush1.msra.mxu0 %v240
    %272 = vmatprep.subr.mxu0 0.0
    %273 = vmatpush1.msra.mxu0 %v241
    %274 = vmatprep.subr.mxu0 0.0
    %275 = vmatpush1.msra.mxu0 %v242
    %276 = vmatprep.subr.mxu0 0.0
    %277 = vmatpush1.msra.mxu0 %v243
    %278 = vmatprep.subr.mxu0 0.0
    %279 = vmatpush1.msra.mxu0 %v244
    %280 = vmatprep.subr.mxu0 0.0
    %281 = vmatpush1.msra.mxu0 %v245
    %282 = vmatprep.subr.mxu0 0.0
    %283 = vmatpush1.msra.mxu0 %v246
    %284 = vmatprep.subr.mxu0 0.0
    %285 = vmatpush1.msra.mxu0 %v247
    %286 = vmatprep.subr.mxu0 0.0
    %287 = vmatpush1.msra.mxu0 %v248
    %288 = vmatprep.subr.mxu0 0.0
    %289 = vmatpush1.msra.mxu0 0.0
    %290 = vmatprep.subr.mxu0 0.0
    %291 = vmatpush1.msra.mxu0 0.0
    %292 = vmatprep.subr.mxu0 0.0
    %293 = vmatpush1.msra.mxu0 0.0
    %294 = vmatprep.subr.mxu0 0.0
    %295 = vmatpush1.msra.mxu0 0.0
    %296 = vmatprep.subr.mxu0 0.0
    %297 = vmatpush1.msra.mxu0 0.0
    %298 = vmatprep.subr.mxu0 0.0
    %299 = vmatpush1.msra.mxu0 0.0
    %300 = vmatprep.subr.mxu0 0.0
    %301 = vmatpush1.msra.mxu0 0.0
    %302 = vmatprep.subr.mxu0 0.0
    %303 = vmatpush1.msra.mxu0 0.0
    %304 = vmatprep.subr.mxu0 0.0
    %305 = vmatpush1.msra.mxu0 0.0
    %306 = vmatprep.subr.mxu0 0.0
    %307 = vmatpush1.msra.mxu0 0.0
    %308 = vmatprep.subr.mxu0 0.0
    %309 = vmatpush1.msra.mxu0 0.0
    %310 = vmatprep.subr.mxu0 0.0
    %311 = vmatpush1.msra.mxu0 0.0
    %312 = vmatprep.subr.mxu0 0.0
    %313 = vmatpush1.msra.mxu0 0.0
    %314 = vmatprep.subr.mxu0 0.0
    %315 = vmatpush1.msra.mxu0 0.0
    %316 = vmatprep.subr.mxu0 0.0
    %317 = vmatpush1.msra.mxu0 0.0
    %318 = vmatprep.subr.mxu0 0.0
    %319 = vmatpush1.msra.mxu0 0.0
    %320 = vmatprep.mubr.f32.mxu0 0.0
    %321 = vmatmul.mubr.f32.gmra.mrb[0].mxu0 %v231
    %v322 = vpop.f32.mrb[0].mxu0
    %v323 = vadd.f32 %v254, %v322
    %v324 = vpop.f32.mrb[0].mxu0
    %325 = vmatprep.mubr.f32.mxu0 0.0
    %326 = vmatmul.mubr.f32.gmra.mrb[0].mxu0 %v232
    %v327 = vpop.f32.mrb[0].mxu0
    %v328 = vadd.f32 %v254, %v327
    %v329 = vpop.f32.mrb[0].mxu0
    %330 = vdwg.mxu0
    %vm331 = vcmp.gt.f32.partialorder %v323, 0.0
    %vm332 = vcmp.gt.f32.partialorder %v328, 0.0
    %v333 = vmul.f32 %v323, 0.01
    %v334 = vmul.f32 %v328, 0.01
    %v335 = vsel %vm331, %v323, %v333
    %v336 = vsel %vm332, %v328, %v334
    %v337 = vld [vmem:[%s7] sm:$0xff]
    %v338 = vld [vmem:[%s7 + $0x8] sm:$0xff]
    %v339 = vld [vmem:[%s7 + $0x10] sm:$0xff]
    %v340 = vld [vmem:[%s7 + $0x18] sm:$0xff]
    %v341 = vld [vmem:[%s7 + $0x20] sm:$0xff]
    %v342 = vld [vmem:[%s7 + $0x28] sm:$0xff]
    %v343 = vld [vmem:[%s7 + $0x30] sm:$0xff]
    %v344 = vld [vmem:[%s7 + $0x38] sm:$0xff]
    %v345 = vld [vmem:[%s7 + $0x40] sm:$0xff]
    %v346 = vld [vmem:[%s7 + $0x48] sm:$0xff]
    %v347 = vld [vmem:[%s7 + $0x50] sm:$0xff]
    %v348 = vld [vmem:[%s7 + $0x58] sm:$0xff]
    %v349 = vld [vmem:[%s7 + $0x60] sm:$0xff]
    %v350 = vld [vmem:[%s7 + $0x68] sm:$0xff]
    %v351 = vld [vmem:[%s7 + $0x70] sm:$0xff]
    %v352 = vld [vmem:[%s7 + $0x78] sm:$0xff]
    %v353 = vld [vmem:[%s8] sm:$0x1]
    %v355 = vlaneseq
    %v356 = vshrl.u32 %v355, 7
    %v357 = vsub.s32 0, %v356
    %v358 = vrot.slane %v353, %v357
    %360 = vmatprep.subr.mxu0 0.0
    %361 = vmatpush1.msra.mxu0 %v337
    %362 = vmatprep.subr.mxu0 0.0
    %363 = vmatpush1.msra.mxu0 %v338
    %364 = vmatprep.subr.mxu0 0.0
    %365 = vmatpush1.msra.mxu0 %v339
    %366 = vmatprep.subr.mxu0 0.0
    %367 = vmatpush1.msra.mxu0 %v340
    %368 = vmatprep.subr.mxu0 0.0
    %369 = vmatpush1.msra.mxu0 %v341
    %370 = vmatprep.subr.mxu0 0.0
    %371 = vmatpush1.msra.mxu0 %v342
    %372 = vmatprep.subr.mxu0 0.0
    %373 = vmatpush1.msra.mxu0 %v343
    %374 = vmatprep.subr.mxu0 0.0
    %375 = vmatpush1.msra.mxu0 %v344
    %376 = vmatprep.subr.mxu0 0.0
    %377 = vmatpush1.msra.mxu0 %v345
    %378 = vmatprep.subr.mxu0 0.0
    %379 = vmatpush1.msra.mxu0 %v346
    %380 = vmatprep.subr.mxu0 0.0
    %381 = vmatpush1.msra.mxu0 %v347
    %382 = vmatprep.subr.mxu0 0.0
    %383 = vmatpush1.msra.mxu0 %v348
    %384 = vmatprep.subr.mxu0 0.0
    %385 = vmatpush1.msra.mxu0 %v349
    %386 = vmatprep.subr.mxu0 0.0
    %387 = vmatpush1.msra.mxu0 %v350
    %388 = vmatprep.subr.mxu0 0.0
    %389 = vmatpush1.msra.mxu0 %v351
    %390 = vmatprep.subr.mxu0 0.0
    %391 = vmatpush1.msra.mxu0 %v352
    %392 = vmatprep.subr.mxu0 0.0
    %393 = vmatpush1.msra.mxu0 0.0
    %394 = vmatprep.subr.mxu0 0.0
    %395 = vmatpush1.msra.mxu0 0.0
    %396 = vmatprep.subr.mxu0 0.0
    %397 = vmatpush1.msra.mxu0 0.0
    %398 = vmatprep.subr.mxu0 0.0
    %399 = vmatpush1.msra.mxu0 0.0
    %400 = vmatprep.subr.mxu0 0.0
    %401 = vmatpush1.msra.mxu0 0.0
    %402 = vmatprep.subr.mxu0 0.0
    %403 = vmatpush1.msra.mxu0 0.0
    %404 = vmatprep.subr.mxu0 0.0
    %405 = vmatpush1.msra.mxu0 0.0
    %406 = vmatprep.subr.mxu0 0.0
    %407 = vmatpush1.msra.mxu0 0.0
    %408 = vmatprep.subr.mxu0 0.0
    %409 = vmatpush1.msra.mxu0 0.0
    %410 = vmatprep.subr.mxu0 0.0
    %411 = vmatpush1.msra.mxu0 0.0
    %412 = vmatprep.subr.mxu0 0.0
    %413 = vmatpush1.msra.mxu0 0.0
    %414 = vmatprep.subr.mxu0 0.0
    %415 = vmatpush1.msra.mxu0 0.0
    %416 = vmatprep.subr.mxu0 0.0
    %417 = vmatpush1.msra.mxu0 0.0
    %418 = vmatprep.subr.mxu0 0.0
    %419 = vmatpush1.msra.mxu0 0.0
    %420 = vmatprep.subr.mxu0 0.0
    %421 = vmatpush1.msra.mxu0 0.0
    %422 = vmatprep.subr.mxu0 0.0
    %423 = vmatpush1.msra.mxu0 0.0
    %424 = vmatprep.mubr.f32.mxu0 0.0
    %425 = vmatmul.mubr.f32.gmra.mrb[0].mxu0 %v335
    %v426 = vpop.f32.mrb[0].mxu0
    %v427 = vadd.f32 %v358, %v426
    %v428 = vpop.f32.mrb[0].mxu0
    %429 = vmatprep.mubr.f32.mxu0 0.0
    %430 = vmatmul.mubr.f32.gmra.mrb[0].mxu0 %v336
    %v431 = vpop.f32.mrb[0].mxu0
    %v432 = vadd.f32 %v358, %v431
    %v433 = vpop.f32.mrb[0].mxu0
    %434 = vdwg.mxu0
    %vm435 = vcmp.gt.f32.partialorder %v427, 0.0
    %vm436 = vcmp.gt.f32.partialorder %v432, 0.0
    %v437 = vmul.f32 %v427, 0.01
    %v438 = vmul.f32 %v432, 0.01
    %v439 = vsel %vm435, %v427, %v437
    %v440 = vsel %vm436, %v432, %v438
    %v441 = vld [vmem:[%s9] sm:$0xff]
    %v442 = vld [vmem:[%s9 + $0x8] sm:$0xff]
    %v443 = vld [vmem:[%s9 + $0x10] sm:$0xff]
    %v444 = vld [vmem:[%s9 + $0x18] sm:$0xff]
    %v445 = vld [vmem:[%s9 + $0x20] sm:$0xff]
    %v446 = vld [vmem:[%s9 + $0x28] sm:$0xff]
    %v447 = vld [vmem:[%s9 + $0x30] sm:$0xff]
    %v448 = vld [vmem:[%s9 + $0x38] sm:$0xff]
    %v449 = vld [vmem:[%s9 + $0x40] sm:$0xff]
    %v450 = vld [vmem:[%s9 + $0x48] sm:$0xff]
    %v451 = vld [vmem:[%s9 + $0x50] sm:$0xff]
    %v452 = vld [vmem:[%s9 + $0x58] sm:$0xff]
    %v453 = vld [vmem:[%s9 + $0x60] sm:$0xff]
    %v454 = vld [vmem:[%s9 + $0x68] sm:$0xff]
    %v455 = vld [vmem:[%s9 + $0x70] sm:$0xff]
    %v456 = vld [vmem:[%s9 + $0x78] sm:$0xff]
    %v457 = vld [vmem:[%s10] sm:$0x1]
    %v459 = vlaneseq
    %v460 = vshrl.u32 %v459, 7
    %v461 = vsub.s32 0, %v460
    %v462 = vrot.slane %v457, %v461
    %464 = vmatprep.subr.mxu0 0.0
    %465 = vmatpush1.msra.mxu0 %v441
    %466 = vmatprep.subr.mxu0 0.0
    %467 = vmatpush1.msra.mxu0 %v442
    %468 = vmatprep.subr.mxu0 0.0
    %469 = vmatpush1.msra.mxu0 %v443
    %470 = vmatprep.subr.mxu0 0.0
    %471 = vmatpush1.msra.mxu0 %v444
    %472 = vmatprep.subr.mxu0 0.0
    %473 = vmatpush1.msra.mxu0 %v445
    %474 = vmatprep.subr.mxu0 0.0
    %475 = vmatpush1.msra.mxu0 %v446
    %476 = vmatprep.subr.mxu0 0.0
    %477 = vmatpush1.msra.mxu0 %v447
    %478 = vmatprep.subr.mxu0 0.0
    %479 = vmatpush1.msra.mxu0 %v448
    %480 = vmatprep.subr.mxu0 0.0
    %481 = vmatpush1.msra.mxu0 %v449
    %482 = vmatprep.subr.mxu0 0.0
    %483 = vmatpush1.msra.mxu0 %v450
    %484 = vmatprep.subr.mxu0 0.0
    %485 = vmatpush1.msra.mxu0 %v451
    %486 = vmatprep.subr.mxu0 0.0
    %487 = vmatpush1.msra.mxu0 %v452
    %488 = vmatprep.subr.mxu0 0.0
    %489 = vmatpush1.msra.mxu0 %v453
    %490 = vmatprep.subr.mxu0 0.0
    %491 = vmatpush1.msra.mxu0 %v454
    %492 = vmatprep.subr.mxu0 0.0
    %493 = vmatpush1.msra.mxu0 %v455
    %494 = vmatprep.subr.mxu0 0.0
    %495 = vmatpush1.msra.mxu0 %v456
    %496 = vmatprep.subr.mxu0 0.0
    %497 = vmatpush1.msra.mxu0 0.0
    %498 = vmatprep.subr.mxu0 0.0
    %499 = vmatpush1.msra.mxu0 0.0
    %500 = vmatprep.subr.mxu0 0.0
    %501 = vmatpush1.msra.mxu0 0.0
    %502 = vmatprep.subr.mxu0 0.0
    %503 = vmatpush1.msra.mxu0 0.0
    %504 = vmatprep.subr.mxu0 0.0
    %505 = vmatpush1.msra.mxu0 0.0
    %506 = vmatprep.subr.mxu0 0.0
    %507 = vmatpush1.msra.mxu0 0.0
    %508 = vmatprep.subr.mxu0 0.0
    %509 = vmatpush1.msra.mxu0 0.0
    %510 = vmatprep.subr.mxu0 0.0
    %511 = vmatpush1.msra.mxu0 0.0
    %512 = vmatprep.subr.mxu0 0.0
    %513 = vmatpush1.msra.mxu0 0.0
    %514 = vmatprep.subr.mxu0 0.0
    %515 = vmatpush1.msra.mxu0 0.0
    %516 = vmatprep.subr.mxu0 0.0
    %517 = vmatpush1.msra.mxu0 0.0
    %518 = vmatprep.subr.mxu0 0.0
    %519 = vmatpush1.msra.mxu0 0.0
    %520 = vmatprep.subr.mxu0 0.0
    %521 = vmatpush1.msra.mxu0 0.0
    %522 = vmatprep.subr.mxu0 0.0
    %523 = vmatpush1.msra.mxu0 0.0
    %524 = vmatprep.subr.mxu0 0.0
    %525 = vmatpush1.msra.mxu0 0.0
    %526 = vmatprep.subr.mxu0 0.0
    %527 = vmatpush1.msra.mxu0 0.0
    %528 = vmatprep.mubr.f32.mxu0 0.0
    %529 = vmatmul.mubr.f32.gmra.mrb[0].mxu0 %v439
    %v530 = vpop.f32.mrb[0].mxu0
    %v531 = vadd.f32 %v462, %v530
    %v532 = vpop.f32.mrb[0].mxu0
    %533 = vmatprep.mubr.f32.mxu0 0.0
    %534 = vmatmul.mubr.f32.gmra.mrb[0].mxu0 %v440
    %v535 = vpop.f32.mrb[0].mxu0
    %v536 = vadd.f32 %v462, %v535
    %v537 = vpop.f32.mrb[0].mxu0
    %538 = vdwg.mxu0
    %vm539 = vcmp.gt.f32.partialorder %v531, 0.0
    %vm540 = vcmp.gt.f32.partialorder %v536, 0.0
    %v541 = vmul.f32 %v531, 0.01
    %v542 = vmul.f32 %v536, 0.01
    %v543 = vsel %vm539, %v531, %v541
    %v544 = vsel %vm540, %v536, %v542
    %v545 = vld [vmem:[%s11] sm:$0x1]
    %s546 = sld [smem:[#allocation2]]
    %v547 = vstv %s546
    %548 = vmatprep.subr.mxu0 0.0
    %549 = vmatpush1.xpose.msra.mxu0 %v543
    %550 = vmatprep.subr.mxu0 0.0
    %551 = vmatpush1.xpose.msra.mxu0 %v544
    %552 = vmatprep.subr.mxu0 0.0
    %553 = vmatpush1.xpose.msra.mxu0 0.0
    %554 = vmatprep.subr.mxu0 0.0
    %555 = vmatpush1.xpose.msra.mxu0 0.0
    %556 = vmatprep.subr.mxu0 0.0
    %557 = vmatpush1.xpose.msra.mxu0 0.0
    %558 = vmatprep.subr.mxu0 0.0
    %559 = vmatpush1.xpose.msra.mxu0 0.0
    %560 = vmatprep.subr.mxu0 0.0
    %561 = vmatpush1.xpose.msra.mxu0 0.0
    %562 = vmatprep.subr.mxu0 0.0
    %563 = vmatpush1.xpose.msra.mxu0 0.0
    %564 = vmatprep.subr.mxu0 0.0
    %565 = vmatpush1.xpose.msra.mxu0 0.0
    %566 = vmatprep.subr.mxu0 0.0
    %567 = vmatpush1.xpose.msra.mxu0 0.0
    %568 = vmatprep.subr.mxu0 0.0
    %569 = vmatpush1.xpose.msra.mxu0 0.0
    %570 = vmatprep.subr.mxu0 0.0
    %571 = vmatpush1.xpose.msra.mxu0 0.0
    %572 = vmatprep.subr.mxu0 0.0
    %573 = vmatpush1.xpose.msra.mxu0 0.0
    %574 = vmatprep.subr.mxu0 0.0
    %575 = vmatpush1.xpose.msra.mxu0 0.0
    %576 = vmatprep.subr.mxu0 0.0
    %577 = vmatpush1.xpose.msra.mxu0 0.0
    %578 = vmatprep.subr.mxu0 0.0
    %579 = vmatpush1.xpose.msra.mxu0 0.0
    %580 = vmatprep.subr.mxu0 0.0
    %581 = vmatpush1.xpose.msra.mxu0 0.0
    %582 = vmatprep.subr.mxu0 0.0
    %583 = vmatpush1.xpose.msra.mxu0 0.0
    %584 = vmatprep.subr.mxu0 0.0
    %585 = vmatpush1.xpose.msra.mxu0 0.0
    %586 = vmatprep.subr.mxu0 0.0
    %587 = vmatpush1.xpose.msra.mxu0 0.0
    %588 = vmatprep.subr.mxu0 0.0
    %589 = vmatpush1.xpose.msra.mxu0 0.0
    %590 = vmatprep.subr.mxu0 0.0
    %591 = vmatpush1.xpose.msra.mxu0 0.0
    %592 = vmatprep.subr.mxu0 0.0
    %593 = vmatpush1.xpose.msra.mxu0 0.0
    %594 = vmatprep.subr.mxu0 0.0
    %595 = vmatpush1.xpose.msra.mxu0 0.0
    %596 = vmatprep.subr.mxu0 0.0
    %597 = vmatpush1.xpose.msra.mxu0 0.0
    %598 = vmatprep.subr.mxu0 0.0
    %599 = vmatpush1.xpose.msra.mxu0 0.0
    %600 = vmatprep.subr.mxu0 0.0
    %601 = vmatpush1.xpose.msra.mxu0 0.0
    %602 = vmatprep.subr.mxu0 0.0
    %603 = vmatpush1.xpose.msra.mxu0 0.0
    %604 = vmatprep.subr.mxu0 0.0
    %605 = vmatpush1.xpose.msra.mxu0 0.0
    %606 = vmatprep.subr.mxu0 0.0
    %607 = vmatpush1.xpose.msra.mxu0 0.0
    %608 = vmatprep.subr.mxu0 0.0
    %609 = vmatpush1.xpose.msra.mxu0 0.0
    %610 = vmatprep.subr.mxu0 0.0
    %611 = vmatpush1.xpose.msra.mxu0 0.0
    %612 = vmatprep.mubr.f32.mxu0 0.0
    %613 = vmatmul.mubr.f32.gmra.mrb[0].mxu0 %v545
    %v614 = vpop.f32.mrb[0].mxu0
    %v615 = vadd.f32 %v547, %v614
    %v616 = vpop.f32.mrb[0].mxu0
    %617 = vdwg.mxu0
    %vm618 = vcmask 122880
    %619 = vst.msk [vmem:[#allocation3] sm:$0x1] %vm618, %v615
    // Predicated region
    $region54: #{smart_critic_forward.1} parent=1 // pred_check
      _
    $region55: #{smart_critic_forward.1} parent=1 // pred_check_branch
      %621 = sbr.rel (0) target = $region57
    $region56: #{smart_critic_forward.1} parent=1 // pred_region
      %s623 = ssub.s32 16, 16
      %624 = vsyncadd [#allocation4], %s623
      %s626 = sshll.u32 [#allocation3], 4
      %s627 = int_to_ptr.vmem [resolvable:$true] %s626
      %629 = dma.vmem_to_hbm [thread:$0]  %s627, 16, %s13, [#allocation4]
    $region57: #{smart_critic_forward.1} parent=1 // pred_fallthru
      _
    // Predicated region
    $region58: #{smart_critic_forward.1} parent=1 // pred_check
      _
    $region59: #{smart_critic_forward.1} parent=1 // pred_check_branch
      %631 = sbr.rel (0) target = $region61
    $region60: #{smart_critic_forward.1} parent=1 // pred_region
      %632 = dma.done [#allocation4], 16
    $region61: #{smart_critic_forward.1} parent=1 // pred_fallthru
      _
    %633 = vsyncpa [#allocation4], 1

</llo_original>
